<compile_context>
chip_gen: v6e
topology: v6e:2x2x1
jax: 0.10.0
libtpu: 0.0.40
codegen_flags: <defaults>
</compile_context>

<pallas_src>
import functools

import jax
import jax.numpy as jnp
from jax import lax
from jax.experimental import pallas as pl
from jax.experimental.pallas import tpu as pltpu


def _round_up(x, m):
    return (x + m - 1) // m * m


# ----------------------------------------------------------------------------
# Kernel factory: fused conv3x3 -> bn1 -> relu -> conv1x1 -> bn2
#                 (+ downsample conv1x1 -> bn  OR  raw identity) -> add -> relu
# ----------------------------------------------------------------------------
def _make_block_kernel(offsets, off_d, has_downsample):
    """offsets: static flat-row offsets of the conv taps; off_d: identity tap."""
    n_taps = len(offsets)
    id_tap = offsets.index(off_d) if off_d in offsets else None

    def _conv1_and_identity(xf_ref, w1_ref, rows):
        """conv1 as n_taps shifted matmuls (f32 acc); also returns the identity
        tap rows, reusing the matching conv tap load when possible."""
        x_id = None
        acc = None
        for t in range(n_taps):
            xt = xf_ref[0, pl.ds(offsets[t], rows), :]
            if t == id_tap:
                x_id = xt
            d = jnp.dot(xt, w1_ref[t], preferred_element_type=jnp.float32)
            acc = d if acc is None else acc + d
        if x_id is None:
            x_id = xf_ref[0, pl.ds(off_d, rows), :]
        return acc, x_id

    if has_downsample:
        def kernel(xf_ref, w1_ref, b1_ref, w2_ref, wd_ref, bsum_ref, out_ref):
            rows = out_ref.shape[1]
            acc, x_id = _conv1_and_identity(xf_ref, w1_ref, rows)
            # bn1 scale is folded into w1; only bias + relu here.
            h = jnp.maximum(acc + b1_ref[...], 0.0).astype(jnp.bfloat16)
            out2 = jnp.dot(h, w2_ref[...], preferred_element_type=jnp.float32)
            iden = jnp.dot(x_id, wd_ref[...], preferred_element_type=jnp.float32)
            out_ref[0] = jnp.maximum(out2 + iden + bsum_ref[...], 0.0
                                     ).astype(out_ref.dtype)
    else:
        def kernel(xf_ref, w1_ref, b1_ref, w2_ref, b2_ref, out_ref):
            rows = out_ref.shape[1]
            acc, x_id = _conv1_and_identity(xf_ref, w1_ref, rows)
            h = jnp.maximum(acc + b1_ref[...], 0.0).astype(jnp.bfloat16)
            out2 = jnp.dot(h, w2_ref[...], preferred_element_type=jnp.float32)
            # identity path: just the input rows (no matmul, no eye matrix).
            out_ref[0] = jnp.maximum(out2 + x_id.astype(jnp.float32)
                                     + b2_ref[...], 0.0).astype(out_ref.dtype)
    return kernel


# ----------------------------------------------------------------------------
# Wrapper-side preparation (cheap, ~1x-traffic layout work; no im2col)
# ----------------------------------------------------------------------------
def _bn_fold(gamma, beta, mean, var, eps=1e-5):
    scale = gamma / jnp.sqrt(var + eps)
    return scale, beta - mean * scale


def _prepare_input(x_nhwc, stride):
    """Pad + (for stride>1) space-to-depth + flatten rows, channel-pad to 128."""
    N, H, W, C = x_nhwc.shape
    s = stride
    Ho = (H + 2 - 3) // s + 1
    Wo = (W + 2 - 3) // s + 1
    a_max = 2 // s                      # spatial tap extent - 1 in s2d space
    A = a_max + 1                       # conv becomes an AxA stride-1 conv
    He, We = Ho + a_max, Wo + a_max
    Hp, Wp = s * He, s * We

    xp = jnp.pad(x_nhwc, ((0, 0),
                          (1, max(Hp - H - 1, 0)),
                          (1, max(Wp - W - 1, 0)),
                          (0, 0)))[:, :Hp, :Wp, :]

    # space-to-depth: xs[n, h2, w2, (ph*s+pw)*C + c] = xp[n, s*h2+ph, s*w2+pw, c]
    xs = xp.reshape(N, He, s, We, s, C).transpose(0, 1, 3, 2, 4, 5)
    xs = xs.reshape(N, He, We, s * s * C)

    c_exp = s * s * C
    Cp = _round_up(c_exp, 128)                      # lane-dense / MXU-aligned K
    xs = jnp.pad(xs, ((0, 0), (0, 0), (0, 0), (0, Cp - c_exp)))

    offsets = tuple(ah * We + aw for ah in range(A) for aw in range(A))
    a_d, _ = divmod(1, s)                           # identity tap location
    off_d = a_d * We + a_d

    Lout = _round_up(Ho * We, 8)
    Lin = _round_up(max(max(offsets), off_d) + Lout, 8)

    xf = xs.reshape(N, He * We, Cp)
    xf = jnp.pad(xf, ((0, 0), (0, Lin - He * We), (0, 0))).astype(jnp.bfloat16)

    geom = dict(Ho=Ho, Wo=Wo, We=We, Lout=Lout, Lin=Lin, Cp=Cp,
                offsets=offsets, off_d=off_d)
    return xf, geom


def _expand_conv3x3(w, stride, scale, Cp, Pp):
    """torch (P, Cin, 3, 3) -> (A*A, Cp, Pp) bf16 with bn scale folded in."""
    P_, Cin = w.shape[0], w.shape[1]
    s = stride
    A = 2 // s + 1
    w_t = jnp.transpose(w, (2, 3, 1, 0))            # (3, 3, Cin, P)
    w1e = jnp.zeros((A, A, s, s, Cin, P_), jnp.float32)
    for kh in range(3):
        ah, ph = divmod(kh, s)
        for kw in range(3):
            aw, pw = divmod(kw, s)
            w1e = w1e.at[ah, aw, ph, pw].set(w_t[kh, kw])
    w1e = w1e.reshape(A * A, s * s * Cin, P_) * scale.reshape(1, 1, P_)
    w1e = jnp.pad(w1e, ((0, 0), (0, Cp - s * s * Cin), (0, Pp - P_)))
    return w1e.astype(jnp.bfloat16)


def _expand_conv1x1_ds(wd, stride, scale, Cp, Pp):
    """Downsample 1x1 conv -> (Cp, Pp) bf16 aligned with the s2d channel layout."""
    P_, Cin = wd.shape[0], wd.shape[1]
    s = stride
    _, p = divmod(1, s)
    w = jnp.transpose(wd[:, :, 0, 0], (1, 0)) * scale.reshape(1, P_)   # (Cin, P)
    wde = jnp.zeros((s, s, Cin, P_), jnp.float32).at[p, p].set(w)
    wde = wde.reshape(s * s * Cin, P_)
    wde = jnp.pad(wde, ((0, Cp - s * s * Cin), (0, Pp - P_)))
    return wde.astype(jnp.bfloat16)


@functools.partial(jax.jit, static_argnames=("stride",))
def basic_block_forward(x_nchw, params, stride):
    """Forward pass of BasicBlock (eval-mode BN). x_nchw: (N, Cin, H, W) f32."""
    N, Cin, H, W = x_nchw.shape
    P = params["w1"].shape[0]
    has_ds = params["wd"] is not None
    if not has_ds:
        assert stride == 1 and Cin == P, \
            "identity path requires stride == 1 and inplanes == planes"

    # TODO(synk): in an NHWC end-to-end model these two layout transposes
    # (here and at the return) would be elided / fused into neighbours.
    x = jnp.transpose(x_nchw, (0, 2, 3, 1))         # NHWC
    xf, g = _prepare_input(x, stride)
    Cp = g["Cp"]
    Pp = _round_up(P, 128)                          # lane-dense output planes

    s1, b1 = _bn_fold(*params["bn1"])
    s2, b2 = _bn_fold(*params["bn2"])

    w1e = _expand_conv3x3(params["w1"], stride, s1, Cp, Pp)     # (T, Cp, Pp)
    w2m = jnp.transpose(params["w2"][:, :, 0, 0], (1, 0)) * s2.reshape(1, P)
    w2m = jnp.pad(w2m, ((0, Pp - P), (0, Pp - P))).astype(jnp.bfloat16)
    b1p = jnp.pad(b1, (0, Pp - P)).reshape(1, Pp).astype(jnp.float32)

    Lout, Lin = g["Lout"], g["Lin"]
    n_taps = len(g["offsets"])

    common_specs = [
        pl.BlockSpec((1, Lin, Cp), lambda n: (n, 0, 0)),     # per-image rows
        pl.BlockSpec((n_taps, Cp, Pp), lambda n: (0, 0, 0)), # conv1 weights
        pl.BlockSpec((1, Pp), lambda n: (0, 0)),             # bn1 bias
        pl.BlockSpec((Pp, Pp), lambda n: (0, 0)),            # conv2 weights
    ]
    out_spec = pl.BlockSpec((1, Lout, Pp), lambda n: (n, 0, 0))
    cparams = pltpu.CompilerParams(
        dimension_semantics=("parallel",),          # batch images split on v7x TCs
        vmem_limit_bytes=48 * 1024 * 1024)          # explicit budget (< v7x 64 MiB)

    # Advisory cost estimate (MXU flops + actual HBM bytes touched).
    flops = 2 * N * Lout * Pp * (n_taps * Cp + Pp + (Cp if has_ds else 0))
    bytes_accessed = (N * Lin * Cp * 2                     # activations (bf16)
                      + (n_taps + 1 + (1 if has_ds else 0)) * Cp * Pp * 2
                      + N * Lout * Pp * 4)                 # output (f32)
    cost = pl.CostEstimate(flops=flops, transcendentals=0,
                           bytes_accessed=bytes_accessed)

    if has_ds:
        sd, bd = _bn_fold(*params["bnd"])
        wde = _expand_conv1x1_ds(params["wd"], stride, sd, Cp, Pp)
        bsum = jnp.pad(b2 + bd, (0, Pp - P)).reshape(1, Pp).astype(jnp.float32)
        kernel = _make_block_kernel(g["offsets"], g["off_d"], True)
        in_specs = common_specs + [
            pl.BlockSpec((Cp, Pp), lambda n: (0, 0)),        # downsample weights
            pl.BlockSpec((1, Pp), lambda n: (0, 0)),         # combined bias
        ]
        args = (xf, w1e, b1p, w2m, wde, bsum)
    else:
        b2p = jnp.pad(b2, (0, Pp - P)).reshape(1, Pp).astype(jnp.float32)
        kernel = _make_block_kernel(g["offsets"], g["off_d"], False)
        in_specs = common_specs + [
            pl.BlockSpec((1, Pp), lambda n: (0, 0)),         # bn2 bias
        ]
        args = (xf, w1e, b1p, w2m, b2p)

    out_flat = pl.pallas_call(
        kernel,
        out_shape=jax.ShapeDtypeStruct((N, Lout, Pp), jnp.float32),
        grid_spec=pltpu.PrefetchScalarGridSpec(
            num_scalar_prefetch=0,
            grid=(N,),
            in_specs=in_specs,
            out_specs=out_spec),
        compiler_params=cparams,
        cost_estimate=cost,
    )(*args)

    Ho, Wo, We = g["Ho"], g["Wo"], g["We"]
    out = out_flat[:, :Ho * We, :].reshape(N, Ho, We, Pp)[:, :, :Wo, :P]
    return jnp.transpose(out, (0, 3, 1, 2))         # back to NCHW


# ----------------------------------------------------------------------------
# Pure-JAX reference (matches PyTorch BasicBlock.forward in eval mode)
# ----------------------------------------------------------------------------
def basic_block_reference(x_nchw, params, stride, eps=1e-5):
    def conv(x, w, st, pad):
        return lax.conv_general_dilated(
            x, w, window_strides=(st, st),
            padding=((pad, pad), (pad, pad)),
            dimension_numbers=("NCHW", "OIHW", "NCHW"))

    def bn(x, p):
        g, b, m, v = p
        sh = (1, -1, 1, 1)
        return (x - m.reshape(sh)) / jnp.sqrt(v.reshape(sh) + eps) \
            * g.reshape(sh) + b.reshape(sh)

    out = conv(x_nchw, params["w1"], stride, 1)
    out = jnp.maximum(bn(out, params["bn1"]), 0.0)
    out = bn(conv(out, params["w2"], 1, 0), params["bn2"])
    if params["wd"] is not None:
        identity = bn(conv(x_nchw, params["wd"], stride, 0), params["bnd"])
    else:
        identity = x_nchw
    return jnp.maximum(out + identity, 0.0)


# ----------------------------------------------------------------------------
# Deterministic parameter init (BatchNorm evaluated with running stats)
# ----------------------------------------------------------------------------
def init_params(key, inplanes, planes, stride):
    ks = jax.random.split(key, 6)

    def bn_params(k, c):
        k0, k1, k2, k3 = jax.random.split(k, 4)
        gamma = 1.0 + 0.1 * jax.random.normal(k0, (c,), jnp.float32)
        beta = 0.1 * jax.random.normal(k1, (c,), jnp.float32)
        mean = 0.05 * jax.random.normal(k2, (c,), jnp.float32)
        var = 1.0 + jnp.abs(0.1 * jax.random.normal(k3, (c,), jnp.float32))
        return (gamma, beta, mean, var)

    params = {
        "w1": 0.1 * jax.random.normal(ks[0], (planes, inplanes, 3, 3), jnp.float32),
        "bn1": bn_params(ks[1], planes),
        "w2": 0.1 * jax.random.normal(ks[2], (planes, planes, 1, 1), jnp.float32),
        "bn2": bn_params(ks[3], planes),
    }
    if stride != 1 or inplanes != planes:
        params["wd"] = 0.1 * jax.random.normal(
            ks[4], (planes, inplanes, 1, 1), jnp.float32)
        params["bnd"] = bn_params(ks[5], planes)
    else:
        params["wd"] = None
        params["bnd"] = None
    return params


if __name__ == "__main__":
    key = jax.random.PRNGKey(0)
    k_x1, k_p1, k_x2, k_p2 = jax.random.split(key, 4)

    # Case 1: stride=2, inplanes != planes  -> downsample branch exercised.
    N, Cin, H, W = 2, 4, 16, 16
    planes, stride = 8, 2
    x1 = jax.random.normal(k_x1, (N, Cin, H, W), jnp.float32)
    p1 = init_params(k_p1, Cin, planes, stride)
    out1 = jax.block_until_ready(basic_block_forward(x1, p1, stride))
    ref1 = basic_block_reference(x1, p1, stride)
    assert out1.shape == ref1.shape == (N, planes, H // stride, W // stride)
    # bf16 matmul inputs (f32 accumulation) -> loosened tolerance vs f32 ref.
    assert jnp.allclose(out1, ref1, atol=2e-2, rtol=2e-2), \
        f"downsample case: max err {jnp.max(jnp.abs(out1 - ref1))}"

    # Case 2: stride=1, inplanes == planes -> pure identity branch (no matmul).
    N2, C2, H2, W2 = 2, 8, 8, 8
    x2 = jax.random.normal(k_x2, (N2, C2, H2, W2), jnp.float32)
    p2 = init_params(k_p2, C2, C2, 1)
    out2 = jax.block_until_ready(basic_block_forward(x2, p2, 1))
    ref2 = basic_block_reference(x2, p2, 1)
    assert out2.shape == ref2.shape == (N2, C2, H2, W2)
    assert jnp.allclose(out2, ref2, atol=2e-2, rtol=2e-2), \
        f"identity case: max err {jnp.max(jnp.abs(out2 - ref2))}"

    print("KERNEL_OK")
</pallas_src>

<mosaic_0001>
module attributes {stable_mosaic.version = 11 : i64} {
  func.func @kernel(%arg0: i32, %arg1: memref<1x88x128xbf16, #tpu.memory_space<vmem>>, %arg2: memref<4x128x128xbf16, #tpu.memory_space<vmem>>, %arg3: memref<1x128xf32, #tpu.memory_space<vmem>>, %arg4: memref<128x128xbf16, #tpu.memory_space<vmem>>, %arg5: memref<128x128xbf16, #tpu.memory_space<vmem>>, %arg6: memref<1x128xf32, #tpu.memory_space<vmem>>, %arg7: memref<1x72x128xf32, #tpu.memory_space<vmem>>) attributes {dimension_semantics = [#tpu.dimension_semantics<parallel>], iteration_bounds = array<i64: 2>, scalar_prefetch = 0 : i64, scratch_operands = 0 : i64, tpu.core_type = #tpu.core_type<tc>, window_params = [{transform_indices = @transform_0, window_bounds = array<i64: 1, 88, 128>}, {pipeline_mode = #tpu.pipeline_mode<synchronous>, transform_indices = @transform_1, window_bounds = array<i64: 4, 128, 128>}, {pipeline_mode = #tpu.pipeline_mode<synchronous>, transform_indices = @transform_2, window_bounds = array<i64: 1, 128>}, {pipeline_mode = #tpu.pipeline_mode<synchronous>, transform_indices = @transform_3, window_bounds = array<i64: 128, 128>}, {pipeline_mode = #tpu.pipeline_mode<synchronous>, transform_indices = @transform_4, window_bounds = array<i64: 128, 128>}, {pipeline_mode = #tpu.pipeline_mode<synchronous>, transform_indices = @transform_5, window_bounds = array<i64: 1, 128>}, {transform_indices = @transform_6, window_bounds = array<i64: 1, 72, 128>}]} {
    %c0 = arith.constant 0 : index
    %c0_0 = arith.constant 0 : index
    %c0_1 = arith.constant 0 : index
    %0 = vector.load %arg1[%c0, %c0_0, %c0_1] : memref<1x88x128xbf16, #tpu.memory_space<vmem>>, vector<1x72x128xbf16>
    %1 = vector.shape_cast %0 : vector<1x72x128xbf16> to vector<72x128xbf16>
    %c0_2 = arith.constant 0 : index
    %c0_3 = arith.constant 0 : index
    %c0_4 = arith.constant 0 : index
    %2 = vector.load %arg2[%c0_2, %c0_3, %c0_4] : memref<4x128x128xbf16, #tpu.memory_space<vmem>>, vector<1x128x128xbf16>
    %3 = vector.shape_cast %2 : vector<1x128x128xbf16> to vector<128x128xbf16>
    %cst = arith.constant dense<0.000000e+00> : vector<72x128xf32>
    %4 = tpu.matmul %1, %3, %cst {dimension_numbers = #tpu.dot_dimension_numbers<[1], [0], [0], [1], [0, 0, 1, 1], [], []>} : vector<72x128xbf16>, vector<128x128xbf16>, vector<72x128xf32> -> vector<72x128xf32>
    %c0_5 = arith.constant 0 : index
    %c1 = arith.constant 1 : index
    %c0_6 = arith.constant 0 : index
    %5 = vector.load %arg1[%c0_5, %c1, %c0_6] : memref<1x88x128xbf16, #tpu.memory_space<vmem>>, vector<1x72x128xbf16>
    %6 = vector.shape_cast %5 : vector<1x72x128xbf16> to vector<72x128xbf16>
    %c1_7 = arith.constant 1 : index
    %c0_8 = arith.constant 0 : index
    %c0_9 = arith.constant 0 : index
    %7 = vector.load %arg2[%c1_7, %c0_8, %c0_9] : memref<4x128x128xbf16, #tpu.memory_space<vmem>>, vector<1x128x128xbf16>
    %8 = vector.shape_cast %7 : vector<1x128x128xbf16> to vector<128x128xbf16>
    %cst_10 = arith.constant dense<0.000000e+00> : vector<72x128xf32>
    %9 = tpu.matmul %6, %8, %cst_10 {dimension_numbers = #tpu.dot_dimension_numbers<[1], [0], [0], [1], [0, 0, 1, 1], [], []>} : vector<72x128xbf16>, vector<128x128xbf16>, vector<72x128xf32> -> vector<72x128xf32>
    %10 = arith.addf %4, %9 : vector<72x128xf32>
    %c0_11 = arith.constant 0 : index
    %c9 = arith.constant 9 : index
    %c0_12 = arith.constant 0 : index
    %11 = vector.load %arg1[%c0_11, %c9, %c0_12] : memref<1x88x128xbf16, #tpu.memory_space<vmem>>, vector<1x72x128xbf16>
    %12 = vector.shape_cast %11 : vector<1x72x128xbf16> to vector<72x128xbf16>
    %c2 = arith.constant 2 : index
    %c0_13 = arith.constant 0 : index
    %c0_14 = arith.constant 0 : index
    %13 = vector.load %arg2[%c2, %c0_13, %c0_14] : memref<4x128x128xbf16, #tpu.memory_space<vmem>>, vector<1x128x128xbf16>
    %14 = vector.shape_cast %13 : vector<1x128x128xbf16> to vector<128x128xbf16>
    %cst_15 = arith.constant dense<0.000000e+00> : vector<72x128xf32>
    %15 = tpu.matmul %12, %14, %cst_15 {dimension_numbers = #tpu.dot_dimension_numbers<[1], [0], [0], [1], [0, 0, 1, 1], [], []>} : vector<72x128xbf16>, vector<128x128xbf16>, vector<72x128xf32> -> vector<72x128xf32>
    %16 = arith.addf %10, %15 : vector<72x128xf32>
    %c0_16 = arith.constant 0 : index
    %c10 = arith.constant 10 : index
    %c0_17 = arith.constant 0 : index
    %17 = vector.load %arg1[%c0_16, %c10, %c0_17] : memref<1x88x128xbf16, #tpu.memory_space<vmem>>, vector<1x72x128xbf16>
    %18 = vector.shape_cast %17 : vector<1x72x128xbf16> to vector<72x128xbf16>
    %c3 = arith.constant 3 : index
    %c0_18 = arith.constant 0 : index
    %c0_19 = arith.constant 0 : index
    %19 = vector.load %arg2[%c3, %c0_18, %c0_19] : memref<4x128x128xbf16, #tpu.memory_space<vmem>>, vector<1x128x128xbf16>
    %20 = vector.shape_cast %19 : vector<1x128x128xbf16> to vector<128x128xbf16>
    %cst_20 = arith.constant dense<0.000000e+00> : vector<72x128xf32>
    %21 = tpu.matmul %18, %20, %cst_20 {dimension_numbers = #tpu.dot_dimension_numbers<[1], [0], [0], [1], [0, 0, 1, 1], [], []>} : vector<72x128xbf16>, vector<128x128xbf16>, vector<72x128xf32> -> vector<72x128xf32>
    %22 = arith.addf %16, %21 : vector<72x128xf32>
    %c0_21 = arith.constant 0 : index
    %c0_22 = arith.constant 0 : index
    %23 = vector.load %arg3[%c0_21, %c0_22] : memref<1x128xf32, #tpu.memory_space<vmem>>, vector<1x128xf32>
    %24 = vector.broadcast %23 : vector<1x128xf32> to vector<72x128xf32>
    %25 = arith.addf %22, %24 : vector<72x128xf32>
    %cst_23 = arith.constant 0.000000e+00 : f32
    %26 = vector.broadcast %cst_23 : f32 to vector<72x128xf32>
    %27 = arith.maximumf %25, %26 : vector<72x128xf32>
    %28 = arith.truncf %27 : vector<72x128xf32> to vector<72x128xbf16>
    %c0_24 = arith.constant 0 : index
    %c0_25 = arith.constant 0 : index
    %29 = vector.load %arg4[%c0_24, %c0_25] : memref<128x128xbf16, #tpu.memory_space<vmem>>, vector<128x128xbf16>
    %cst_26 = arith.constant dense<0.000000e+00> : vector<72x128xf32>
    %30 = tpu.matmul %28, %29, %cst_26 {dimension_numbers = #tpu.dot_dimension_numbers<[1], [0], [0], [1], [0, 0, 1, 1], [], []>} : vector<72x128xbf16>, vector<128x128xbf16>, vector<72x128xf32> -> vector<72x128xf32>
    %c0_27 = arith.constant 0 : index
    %c0_28 = arith.constant 0 : index
    %31 = vector.load %arg5[%c0_27, %c0_28] : memref<128x128xbf16, #tpu.memory_space<vmem>>, vector<128x128xbf16>
    %cst_29 = arith.constant dense<0.000000e+00> : vector<72x128xf32>
    %32 = tpu.matmul %1, %31, %cst_29 {dimension_numbers = #tpu.dot_dimension_numbers<[1], [0], [0], [1], [0, 0, 1, 1], [], []>} : vector<72x128xbf16>, vector<128x128xbf16>, vector<72x128xf32> -> vector<72x128xf32>
    %33 = arith.addf %30, %32 : vector<72x128xf32>
    %c0_30 = arith.constant 0 : index
    %c0_31 = arith.constant 0 : index
    %34 = vector.load %arg6[%c0_30, %c0_31] : memref<1x128xf32, #tpu.memory_space<vmem>>, vector<1x128xf32>
    %35 = vector.broadcast %34 : vector<1x128xf32> to vector<72x128xf32>
    %36 = arith.addf %33, %35 : vector<72x128xf32>
    %cst_32 = arith.constant 0.000000e+00 : f32
    %37 = vector.broadcast %cst_32 : f32 to vector<72x128xf32>
    %38 = arith.maximumf %36, %37 : vector<72x128xf32>
    %c0_33 = arith.constant 0 : index
    %c0_34 = arith.constant 0 : index
    %c0_35 = arith.constant 0 : index
    %39 = vector.load %arg7[%c0_33, %c0_34, %c0_35] : memref<1x72x128xf32, #tpu.memory_space<vmem>>, vector<1x72x128xf32>
    %40 = vector.shape_cast %39 : vector<1x72x128xf32> to vector<72x128xf32>
    %41 = vector.shape_cast %38 : vector<72x128xf32> to vector<1x72x128xf32>
    tpu.vector_store %arg7[%c0_33, %c0_34, %c0_35], %41 {strides = array<i32>} : memref<1x72x128xf32, #tpu.memory_space<vmem>>, vector<1x72x128xf32>,
    return
  }
  func.func @transform_0(%arg0: i32) -> (i32, i32, i32) {
    %c0_i32 = arith.constant 0 : i32
    %c0_i32_0 = arith.constant 0 : i32
    %c0_i32_1 = arith.constant 0 : i32
    return %arg0, %c0_i32, %c0_i32_0 : i32, i32, i32
  }
  func.func @transform_1(%arg0: i32) -> (i32, i32, i32) {
    %c0_i32 = arith.constant 0 : i32
    %c0_i32_0 = arith.constant 0 : i32
    %c0_i32_1 = arith.constant 0 : i32
    %c0_i32_2 = arith.constant 0 : i32
    return %c0_i32, %c0_i32_0, %c0_i32_1 : i32, i32, i32
  }
  func.func @transform_2(%arg0: i32) -> (i32, i32) {
    %c0_i32 = arith.constant 0 : i32
    %c0_i32_0 = arith.constant 0 : i32
    %c0_i32_1 = arith.constant 0 : i32
    return %c0_i32, %c0_i32_0 : i32, i32
  }
  func.func @transform_3(%arg0: i32) -> (i32, i32) {
    %c0_i32 = arith.constant 0 : i32
    %c0_i32_0 = arith.constant 0 : i32
    %c0_i32_1 = arith.constant 0 : i32
    return %c0_i32, %c0_i32_0 : i32, i32
  }
  func.func @transform_4(%arg0: i32) -> (i32, i32) {
    %c0_i32 = arith.constant 0 : i32
    %c0_i32_0 = arith.constant 0 : i32
    %c0_i32_1 = arith.constant 0 : i32
    return %c0_i32, %c0_i32_0 : i32, i32
  }
  func.func @transform_5(%arg0: i32) -> (i32, i32) {
    %c0_i32 = arith.constant 0 : i32
    %c0_i32_0 = arith.constant 0 : i32
    %c0_i32_1 = arith.constant 0 : i32
    return %c0_i32, %c0_i32_0 : i32, i32
  }
  func.func @transform_6(%arg0: i32) -> (i32, i32, i32) {
    %c0_i32 = arith.constant 0 : i32
    %c0_i32_0 = arith.constant 0 : i32
    %c0_i32_1 = arith.constant 0 : i32
    return %arg0, %c0_i32, %c0_i32_0 : i32, i32, i32
  }
}

</mosaic_0001>

<llo_original>
// kernel: basic_block_forward.1
$region0: #{basic_block_forward.1}
  #allocation0 [shape = 'u32[]', space=smem, size = 0x4, offset = 0x4, fixed_abs, tag = 'smem constant byte address 0x4 - core index']
  #allocation1 [shape = 'u32[144,128]{1,0:T(1,128)}', space=vmem, size = 0x12000, scoped, tag = 'internal scratch']
  %s0 = inlined_call_operand.vmem [shape: bf16[2,88,128], index: 0, kind: input, shape index: {}]
  %s1 = inlined_call_operand.vmem [shape: bf16[4,128,128], index: 1, kind: input, shape index: {}]
  %s2 = inlined_call_operand.vmem [shape: f32[1,128], index: 2, kind: input, shape index: {}]
  %s3 = inlined_call_operand.vmem [shape: bf16[128,128], index: 3, kind: input, shape index: {}]
  %s4 = inlined_call_operand.vmem [shape: bf16[128,128], index: 4, kind: input, shape index: {}]
  %s5 = inlined_call_operand.vmem [shape: f32[1,128], index: 5, kind: input, shape index: {}]
  %s6 = inlined_call_operand.vmem [shape: f32[2,72,128], index: 6, kind: output, shape index: {}]
  %s7 = sld [smem:[#allocation0]]
  $region57: #{basic_block_forward.1} parent=0
    _
  %s9 = ssub.s32 1, %s7
  %s10 = scalar_select 0, %s9, %s7
  loop: start=0, step=1, limit=4
  $region2: #{basic_block_forward.1} parent=0 // loop_pre_header
    _
  $region3: #{basic_block_forward.1} parent=0 // loop_header
    %s12 = sphi 0, %s16
    %p13 = scmp.ge.s32.totalorder %s12, 4
    %s22 = sphi 0, %s24
    %s25 = sphi 0, %s22
    %s26 = sphi 0, %s25
    %s42 = sphi 0, %s26
    %s46 = sphi 0, %s46
    %s48 = sphi 0, %s46
    %s49 = sphi 0, %s48
    %s63 = sphi 0, %s49
    %s67 = sphi 0, %s67
    %s69 = sphi 0, %s67
    %s70 = sphi 0, %s69
    %s84 = sphi 0, %s70
    %s88 = sphi 0, %s88
    %s90 = sphi 0, %s88
    %s91 = sphi 0, %s90
    %s105 = sphi 0, %s91
    %s109 = sphi 0, %s109
    %s111 = sphi 0, %s109
    %s112 = sphi 0, %s111
    %s126 = sphi 0, %s112
    %s130 = sphi 0, %s130
    %s132 = sphi 0, %s130
    %s133 = sphi 0, %s132
    %s147 = sphi 0, %s133
    %s153 = sphi 0, %s155
    %s156 = sphi 0, %s153
    %s157 = sphi 0, %s156
    %s173 = sphi 0, %s157
  $region4: #{basic_block_forward.1} parent=0 // loop_header_branch
    %15 = sbr.rel (%p13) target = $region8
  $region5: #{basic_block_forward.1} parent=0 // loop_body
    %s17 = ssub.s32 %s12, 1
    %s18 = ssub.s32 %s12, 2
    %s19 = sadd.s32 %s12, 1
    %s20 = ssub.s32 %s12, %s19
    %p21 = scmp.eq.s32.totalorder %s20, 0
    %s23 = sadd.s32 %s22, 1
    %s24 = scalar_select %p21, %s22, %s23
    %p27 = pneg %p21
    %p28 = scmp.eq.s32.totalorder %s12, 1
    %p29 = por %p27, %p28
    %p30 = scmp.ne.s32.totalorder %s22, %s25
    %p31 = scmp.eq.s32.totalorder %s12, 0
    %p32 = por %p30, %p31
    %p33 = scmp.ne.s32.totalorder %s22, %s25
    %p34 = scmp.eq.s32.totalorder %s17, 1
    %p35 = por %p33, %p34
    %p36 = scmp.ne.s32.totalorder %s25, %s26
    %p37 = scmp.eq.s32.totalorder %s17, 0
    %p38 = por %p36, %p37
    %p39 = scmp.ne.s32.totalorder %s25, %s26
    %p40 = scmp.eq.s32.totalorder %s18, 1
    %p41 = por %p39, %p40
    %p43 = scmp.ne.s32.totalorder %s26, %s42
    %p44 = scmp.eq.s32.totalorder %s18, 0
    %p45 = por %p43, %p44
    %s47 = sadd.s32 %s46, 1
    %p50 = scmp.eq.s32.totalorder %s12, 1
    %p51 = scmp.ne.s32.totalorder %s46, %s48
    %p52 = scmp.eq.s32.totalorder %s12, 0
    %p53 = por %p51, %p52
    %p54 = scmp.ne.s32.totalorder %s46, %s48
    %p55 = scmp.eq.s32.totalorder %s17, 1
    %p56 = por %p54, %p55
    %p57 = scmp.ne.s32.totalorder %s48, %s49
    %p58 = scmp.eq.s32.totalorder %s17, 0
    %p59 = por %p57, %p58
    %p60 = scmp.ne.s32.totalorder %s48, %s49
    %p61 = scmp.eq.s32.totalorder %s18, 1
    %p62 = por %p60, %p61
    %p64 = scmp.ne.s32.totalorder %s49, %s63
    %p65 = scmp.eq.s32.totalorder %s18, 0
    %p66 = por %p64, %p65
    %s68 = sadd.s32 %s67, 1
    %p71 = scmp.eq.s32.totalorder %s12, 1
    %p72 = scmp.ne.s32.totalorder %s67, %s69
    %p73 = scmp.eq.s32.totalorder %s12, 0
    %p74 = por %p72, %p73
    %p75 = scmp.ne.s32.totalorder %s67, %s69
    %p76 = scmp.eq.s32.totalorder %s17, 1
    %p77 = por %p75, %p76
    %p78 = scmp.ne.s32.totalorder %s69, %s70
    %p79 = scmp.eq.s32.totalorder %s17, 0
    %p80 = por %p78, %p79
    %p81 = scmp.ne.s32.totalorder %s69, %s70
    %p82 = scmp.eq.s32.totalorder %s18, 1
    %p83 = por %p81, %p82
    %p85 = scmp.ne.s32.totalorder %s70, %s84
    %p86 = scmp.eq.s32.totalorder %s18, 0
    %p87 = por %p85, %p86
    %s89 = sadd.s32 %s88, 1
    %p92 = scmp.eq.s32.totalorder %s12, 1
    %p93 = scmp.ne.s32.totalorder %s88, %s90
    %p94 = scmp.eq.s32.totalorder %s12, 0
    %p95 = por %p93, %p94
    %p96 = scmp.ne.s32.totalorder %s88, %s90
    %p97 = scmp.eq.s32.totalorder %s17, 1
    %p98 = por %p96, %p97
    %p99 = scmp.ne.s32.totalorder %s90, %s91
    %p100 = scmp.eq.s32.totalorder %s17, 0
    %p101 = por %p99, %p100
    %p102 = scmp.ne.s32.totalorder %s90, %s91
    %p103 = scmp.eq.s32.totalorder %s18, 1
    %p104 = por %p102, %p103
    %p106 = scmp.ne.s32.totalorder %s91, %s105
    %p107 = scmp.eq.s32.totalorder %s18, 0
    %p108 = por %p106, %p107
    %s110 = sadd.s32 %s109, 1
    %p113 = scmp.eq.s32.totalorder %s12, 1
    %p114 = scmp.ne.s32.totalorder %s109, %s111
    %p115 = scmp.eq.s32.totalorder %s12, 0
    %p116 = por %p114, %p115
    %p117 = scmp.ne.s32.totalorder %s109, %s111
    %p118 = scmp.eq.s32.totalorder %s17, 1
    %p119 = por %p117, %p118
    %p120 = scmp.ne.s32.totalorder %s111, %s112
    %p121 = scmp.eq.s32.totalorder %s17, 0
    %p122 = por %p120, %p121
    %p123 = scmp.ne.s32.totalorder %s111, %s112
    %p124 = scmp.eq.s32.totalorder %s18, 1
    %p125 = por %p123, %p124
    %p127 = scmp.ne.s32.totalorder %s112, %s126
    %p128 = scmp.eq.s32.totalorder %s18, 0
    %p129 = por %p127, %p128
    %s131 = sadd.s32 %s130, 1
    %p134 = scmp.eq.s32.totalorder %s12, 1
    %p135 = scmp.ne.s32.totalorder %s130, %s132
    %p136 = scmp.eq.s32.totalorder %s12, 0
    %p137 = por %p135, %p136
    %p138 = scmp.ne.s32.totalorder %s130, %s132
    %p139 = scmp.eq.s32.totalorder %s17, 1
    %p140 = por %p138, %p139
    %p141 = scmp.ne.s32.totalorder %s132, %s133
    %p142 = scmp.eq.s32.totalorder %s17, 0
    %p143 = por %p141, %p142
    %p144 = scmp.ne.s32.totalorder %s132, %s133
    %p145 = scmp.eq.s32.totalorder %s18, 1
    %p146 = por %p144, %p145
    %p148 = scmp.ne.s32.totalorder %s133, %s147
    %p149 = scmp.eq.s32.totalorder %s18, 0
    %p150 = por %p148, %p149
    %s151 = ssub.s32 %s12, %s19
    %p152 = scmp.eq.s32.totalorder %s151, 0
    %s154 = sadd.s32 %s153, 1
    %s155 = scalar_select %p152, %s153, %s154
    %p158 = pneg %p152
    %p159 = scmp.eq.s32.totalorder %s12, 1
    %p160 = por %p158, %p159
    %p161 = scmp.ne.s32.totalorder %s153, %s156
    %p162 = scmp.eq.s32.totalorder %s12, 0
    %p163 = por %p161, %p162
    %p164 = scmp.ne.s32.totalorder %s153, %s156
    %p165 = scmp.eq.s32.totalorder %s17, 1
    %p166 = por %p164, %p165
    %p167 = scmp.ne.s32.totalorder %s156, %s157
    %p168 = scmp.eq.s32.totalorder %s17, 0
    %p169 = por %p167, %p168
    %p170 = scmp.ne.s32.totalorder %s156, %s157
    %p171 = scmp.eq.s32.totalorder %s18, 1
    %p172 = por %p170, %p171
    %p174 = scmp.ne.s32.totalorder %s157, %s173
    %p175 = scmp.eq.s32.totalorder %s18, 0
    %p176 = por %p174, %p175
    %p177 = scmp.le.s32.totalorder 1, %s12
    %p178 = scmp.lt.s32.totalorder %s12, 3
    %p179 = pnand %p177, %p178
    %p180 = pneg %p179
    // Predicated region
    $region9: #{basic_block_forward.1} parent=5 // pred_check
      _
    $region10: #{basic_block_forward.1} parent=5 // pred_check_branch
      %182 = sbr.rel (%p179) target = $region12
    $region11: #{basic_block_forward.1} parent=5 // pred_region
      %s183 = ssub.s32 %s12, 1
      // Predicated region
      $region13: #{basic_block_forward.1} parent=11 // pred_check
        %p184 = pneg %p59
      $region14: #{basic_block_forward.1} parent=11 // pred_check_branch
        %186 = sbr.rel (%p184) target = $region16
      $region15: #{basic_block_forward.1} parent=11 // pred_region
        _
      $region16: #{basic_block_forward.1} parent=11 // pred_fallthru
        _
      // Predicated region
      $region17: #{basic_block_forward.1} parent=11 // pred_check
        %p187 = pneg %p80
      $region18: #{basic_block_forward.1} parent=11 // pred_check_branch
        %189 = sbr.rel (%p187) target = $region20
      $region19: #{basic_block_forward.1} parent=11 // pred_region
        _
      $region20: #{basic_block_forward.1} parent=11 // pred_fallthru
        _
      // Predicated region
      $region21: #{basic_block_forward.1} parent=11 // pred_check
        %p190 = pneg %p101
      $region22: #{basic_block_forward.1} parent=11 // pred_check_branch
        %192 = sbr.rel (%p190) target = $region24
      $region23: #{basic_block_forward.1} parent=11 // pred_region
        _
      $region24: #{basic_block_forward.1} parent=11 // pred_fallthru
        _
      // Predicated region
      $region25: #{basic_block_forward.1} parent=11 // pred_check
        %p193 = pneg %p122
      $region26: #{basic_block_forward.1} parent=11 // pred_check_branch
        %195 = sbr.rel (%p193) target = $region28
      $region27: #{basic_block_forward.1} parent=11 // pred_region
        _
      $region28: #{basic_block_forward.1} parent=11 // pred_fallthru
        _
      // Predicated region
      $region29: #{basic_block_forward.1} parent=11 // pred_check
        %p196 = pneg %p143
      $region30: #{basic_block_forward.1} parent=11 // pred_check_branch
        %198 = sbr.rel (%p196) target = $region32
      $region31: #{basic_block_forward.1} parent=11 // pred_region
        _
      $region32: #{basic_block_forward.1} parent=11 // pred_fallthru
        _
    $region12: #{basic_block_forward.1} parent=5 // pred_fallthru
      _
    %p199 = scmp.lt.s32.totalorder %s12, 2
    // Predicated region
    $region33: #{basic_block_forward.1} parent=5 // pred_check
      %p200 = pneg %p199
    $region34: #{basic_block_forward.1} parent=5 // pred_check_branch
      %202 = sbr.rel (%p200) target = $region36
    $region35: #{basic_block_forward.1} parent=5 // pred_region
      // Predicated region
      $region37: #{basic_block_forward.1} parent=35 // pred_check
        %p203 = pneg %p32
      $region38: #{basic_block_forward.1} parent=35 // pred_check_branch
        %205 = sbr.rel (%p203) target = $region40
      $region39: #{basic_block_forward.1} parent=35 // pred_region
        %p206 = scmp.lt.s32.totalorder %s12, 1
        %s207 = scalar_select %p206, %s12, 1
        %s208 = smul.addr %s207, 11
        %s209 = smul.addr %s208, 4
        %s210 = scalar_lea.vmem %s0, %s209
      $region40: #{basic_block_forward.1} parent=35 // pred_fallthru
        _
    $region36: #{basic_block_forward.1} parent=5 // pred_fallthru
      _
    %p211 = scmp.le.s32.totalorder 1, %s12
    %p212 = scmp.lt.s32.totalorder %s12, 3
    %p213 = pnand %p211, %p212
    %p214 = pneg %p213
    // Predicated region
    $region41: #{basic_block_forward.1} parent=5 // pred_check
      _
    $region42: #{basic_block_forward.1} parent=5 // pred_check_branch
      %216 = sbr.rel (%p213) target = $region44
    $region43: #{basic_block_forward.1} parent=5 // pred_region
      %s217 = ssub.s32 %s12, 1
      %p218 = scmp.lt.s32.totalorder %s17, 1
      %s219 = scalar_select %p218, %s17, 1
      %s220 = smul.addr %s219, 11
      %s221 = smul.addr %s220, 4
      %s222 = scalar_lea.vmem %s0, %s221
      %p223 = pneg %p38
      %p224 = pneg %p35
      %p225 = pneg %p59
      %p226 = pneg %p56
      %p227 = pneg %p80
      %p228 = pneg %p77
      %p229 = pneg %p101
      %p230 = pneg %p98
      %p231 = pneg %p122
      %p232 = pneg %p119
      %p233 = pneg %p143
      %p234 = pneg %p140
      %p235 = pneg %p169
      %p236 = pneg %p166
      %p237 = scmp.lt.s32.totalorder %s17, 1
      %s238 = scalar_select %p237, %s17, 1
      %s239 = smul.addr %s238, 9
      %s240 = smul.addr %s239, 8
      %s241 = scalar_lea.vmem %s6, %s240
      %p242 = scmp.lt.s32.totalorder %s17, 1
      %s243 = scalar_select %p242, %s17, 1
      %s244 = smul.addr %s243, 11
      %s245 = smul.addr %s244, 4
      %s246 = scalar_lea.vmem %s0, %s245
      %p247 = scmp.lt.s32.totalorder %s17, 1
      %s248 = scalar_select %p247, %s17, 1
      %s249 = smul.addr %s248, 9
      %s250 = smul.addr %s249, 8
      %s251 = scalar_lea.vmem %s6, %s250
      %v253 = vld [vmem:[%s246] sm:$0xf]
      %v254 = vld [vmem:[%s246 + $0x4] sm:$0xf]
      %v255 = vld [vmem:[%s246 + $0x8] sm:$0xf]
      %v256 = vld [vmem:[%s246 + $0xc] sm:$0xf]
      %v257 = vld [vmem:[%s246 + $0x10] sm:$0xf]
      %v258 = vld [vmem:[%s246 + $0x14] sm:$0xf]
      %v259 = vld [vmem:[%s246 + $0x18] sm:$0xf]
      %v260 = vld [vmem:[%s246 + $0x1c] sm:$0xf]
      %v261 = vld [vmem:[%s246 + $0x20] sm:$0xf]
      %v262 = vld [vmem:[%s1] sm:$0xf]
      %v263 = vld [vmem:[%s1 + $0x4] sm:$0xf]
      %v264 = vld [vmem:[%s1 + $0x8] sm:$0xf]
      %v265 = vld [vmem:[%s1 + $0xc] sm:$0xf]
      %v266 = vld [vmem:[%s1 + $0x10] sm:$0xf]
      %v267 = vld [vmem:[%s1 + $0x14] sm:$0xf]
      %v268 = vld [vmem:[%s1 + $0x18] sm:$0xf]
      %v269 = vld [vmem:[%s1 + $0x1c] sm:$0xf]
      %v270 = vld [vmem:[%s1 + $0x20] sm:$0xf]
      %v271 = vld [vmem:[%s1 + $0x24] sm:$0xf]
      %v272 = vld [vmem:[%s1 + $0x28] sm:$0xf]
      %v273 = vld [vmem:[%s1 + $0x2c] sm:$0xf]
      %v274 = vld [vmem:[%s1 + $0x30] sm:$0xf]
      %v275 = vld [vmem:[%s1 + $0x34] sm:$0xf]
      %v276 = vld [vmem:[%s1 + $0x38] sm:$0xf]
      %v277 = vld [vmem:[%s1 + $0x3c] sm:$0xf]
      %v278 = vld [vmem:[%s246 + $0x24] sm:$0x1]
      %s279 = scalar_lea.vmem %s1, 64
      %v280 = vld [vmem:[%s279] sm:$0xf]
      %v281 = vld [vmem:[%s279 + $0x4] sm:$0xf]
      %v282 = vld [vmem:[%s279 + $0x8] sm:$0xf]
      %v283 = vld [vmem:[%s279 + $0xc] sm:$0xf]
      %v284 = vld [vmem:[%s279 + $0x10] sm:$0xf]
      %v285 = vld [vmem:[%s279 + $0x14] sm:$0xf]
      %v286 = vld [vmem:[%s279 + $0x18] sm:$0xf]
      %v287 = vld [vmem:[%s279 + $0x1c] sm:$0xf]
      %v288 = vld [vmem:[%s279 + $0x20] sm:$0xf]
      %v289 = vld [vmem:[%s279 + $0x24] sm:$0xf]
      %v290 = vld [vmem:[%s279 + $0x28] sm:$0xf]
      %v291 = vld [vmem:[%s279 + $0x2c] sm:$0xf]
      %v292 = vld [vmem:[%s279 + $0x30] sm:$0xf]
      %v293 = vld [vmem:[%s279 + $0x34] sm:$0xf]
      %v294 = vld [vmem:[%s279 + $0x38] sm:$0xf]
      %v295 = vld [vmem:[%s279 + $0x3c] sm:$0xf]
      %v306 = vunpack.c.l.b16 %v253
      %v307 = vunpack.c.l.b16 %v254
      %v308 = vunpack.c.l.b16 %v255
      %v309 = vunpack.c.l.b16 %v256
      %v310 = vunpack.c.l.b16 %v257
      %v311 = vunpack.c.l.b16 %v258
      %v312 = vunpack.c.l.b16 %v259
      %v313 = vunpack.c.l.b16 %v260
      %v314 = vunpack.c.l.b16 %v261
      %v315 = vunpack.c.l.b16 %v278
      %v316 = vpack.c.b16 %v307, %v306
      %v317 = vpack.c.b16 %v309, %v308
      %v318 = vpack.c.b16 %v311, %v310
      %v319 = vpack.c.b16 %v313, %v312
      %v320 = vpack.c.b16 %v315, %v314
      %vm321 = vsmask.f32 7424
      %v323 = vshrl.u32 %v316, 16
      %v325 = vshll.u32 %v316, 16
      %v327 = vrot.slane %v325, 1
      %v328 = vor.u32 %v323, %v327
      %v330 = vshll.u32 %v317, 16
      %v332 = vrot.slane %v330, 1
      %v333 = vsel %vm321, %v328, %v332
      %v334 = vshrl.u32 %v317, 16
      %v336 = vor.u32 %v334, %v332
      %v338 = vshll.u32 %v318, 16
      %v340 = vrot.slane %v338, 1
      %v341 = vsel %vm321, %v336, %v340
      %v342 = vshrl.u32 %v318, 16
      %v344 = vor.u32 %v342, %v340
      %v346 = vshll.u32 %v319, 16
      %v348 = vrot.slane %v346, 1
      %v349 = vsel %vm321, %v344, %v348
      %v350 = vshrl.u32 %v319, 16
      %v352 = vor.u32 %v350, %v348
      %v354 = vshll.u32 %v320, 16
      %v356 = vrot.slane %v354, 1
      %v357 = vsel %vm321, %v352, %v356
      %v358 = vshrl.u32 %v320, 16
      %v360 = vor.u32 %v358, %v356
      %v382 = vunpack.c.l.b16 %v280
      %v383 = vunpack.c.l.b16 %v281
      %v384 = vunpack.c.l.b16 %v282
      %v385 = vunpack.c.l.b16 %v283
      %v386 = vunpack.c.l.b16 %v284
      %v387 = vunpack.c.l.b16 %v285
      %v388 = vunpack.c.l.b16 %v286
      %v389 = vunpack.c.l.b16 %v287
      %v390 = vunpack.c.l.b16 %v288
      %v391 = vunpack.c.l.b16 %v289
      %v392 = vunpack.c.l.b16 %v290
      %v393 = vunpack.c.l.b16 %v291
      %v394 = vunpack.c.l.b16 %v292
      %v395 = vunpack.c.l.b16 %v293
      %v396 = vunpack.c.l.b16 %v294
      %v397 = vunpack.c.l.b16 %v295
      %v398 = vpack.c.b16 %v383, %v382
      %v399 = vpack.c.b16 %v385, %v384
      %v400 = vpack.c.b16 %v387, %v386
      %v401 = vpack.c.b16 %v389, %v388
      %v402 = vpack.c.b16 %v391, %v390
      %v403 = vpack.c.b16 %v393, %v392
      %v404 = vpack.c.b16 %v395, %v394
      %v405 = vpack.c.b16 %v397, %v396
      %414 = vmatprep.subr.bf16.mxu0 0
      %415 = vmatpush1.bf16.msra.mxu0 %v405
      %416 = vmatprep.subr.bf16.mxu0 0
      %417 = vmatpush1.bf16.msra.mxu0 %v404
      %418 = vmatprep.subr.bf16.mxu0 0
      %419 = vmatpush1.bf16.msra.mxu0 %v403
      %420 = vmatprep.subr.bf16.mxu0 0
      %421 = vmatpush1.bf16.msra.mxu0 %v402
      %422 = vmatprep.subr.bf16.mxu0 0
      %423 = vmatpush1.bf16.msra.mxu0 %v401
      %424 = vmatprep.subr.bf16.mxu0 0
      %425 = vmatpush1.bf16.msra.mxu0 %v400
      %426 = vmatprep.subr.bf16.mxu0 0
      %427 = vmatpush1.bf16.msra.mxu0 %v399
      %428 = vmatprep.subr.bf16.mxu0 0
      %429 = vmatpush1.bf16.msra.mxu0 %v398
      %430 = vmatprep.subr.bf16.mxu0 0
      %431 = vmatpush2.bf16.msra.mxu0 0
      %432 = vmatprep.subr.bf16.mxu0 0
      %433 = vmatpush2.bf16.msra.mxu0 0
      %434 = vmatprep.subr.bf16.mxu0 0
      %435 = vmatpush2.bf16.msra.mxu0 0
      %436 = vmatprep.subr.bf16.mxu0 0
      %437 = vmatpush2.bf16.msra.mxu0 0
      %438 = vmatprep.subr.bf16.mxu0 0
      %439 = vmatpush2.bf16.msra.mxu0 0
      %440 = vmatprep.subr.bf16.mxu0 0
      %441 = vmatpush2.bf16.msra.mxu0 0
      %442 = vmatprep.subr.bf16.mxu0 0
      %443 = vmatpush2.bf16.msra.mxu0 0
      %444 = vmatprep.subr.bf16.mxu0 0
      %445 = vmatpush2.bf16.msra.mxu0 0
      %446 = vmatprep.mubr.bf16.mxu0 0
      %447 = vmatmul.mubr.bf16.gmra.mxu0 %v333
      %v448 = vpop.f32.mrf.mxu0
      %v449 = vadd.f32 0.0, %v448
      %v450 = vpop.f32.mrf.mxu0
      %v451 = vpop.f32.mrf.mxu0
      %v452 = vadd.f32 0.0, %v451
      %v453 = vpop.f32.mrf.mxu0
      %454 = vmatprep.mubr.bf16.mxu0 0
      %455 = vmatmul.mubr.bf16.gmra.mxu0 %v341
      %v456 = vpop.f32.mrf.mxu0
      %v457 = vadd.f32 0.0, %v456
      %v458 = vpop.f32.mrf.mxu0
      %v459 = vpop.f32.mrf.mxu0
      %v460 = vadd.f32 0.0, %v459
      %v461 = vpop.f32.mrf.mxu0
      %462 = vmatprep.mubr.bf16.mxu0 0
      %463 = vmatmul.mubr.bf16.gmra.mxu0 %v349
      %v464 = vpop.f32.mrf.mxu0
      %v465 = vadd.f32 0.0, %v464
      %v466 = vpop.f32.mrf.mxu0
      %v467 = vpop.f32.mrf.mxu0
      %v468 = vadd.f32 0.0, %v467
      %v469 = vpop.f32.mrf.mxu0
      %470 = vmatprep.mubr.bf16.mxu0 0
      %471 = vmatmul.mubr.bf16.gmra.mxu0 %v357
      %v472 = vpop.f32.mrf.mxu0
      %v473 = vadd.f32 0.0, %v472
      %v474 = vpop.f32.mrf.mxu0
      %v475 = vpop.f32.mrf.mxu0
      %v476 = vadd.f32 0.0, %v475
      %v477 = vpop.f32.mrf.mxu0
      %478 = vmatprep.mubr.bf16.mxu0 0
      %479 = vmatmul.mubr.bf16.gmra.mxu0 %v360
      %v480 = vpop.f32.mrf.mxu0
      %v481 = vadd.f32 0.0, %v480
      %v482 = vpop.f32.mrf.mxu0
      %v483 = vpop.f32.mrf.mxu0
      %v484 = vpop.f32.mrf.mxu0
      %485 = vdwg.mxu0
      %v486 = vpack.c.b16 %v314, %v314
      %v508 = vunpack.c.l.b16 %v262
      %v509 = vunpack.c.l.b16 %v263
      %v510 = vunpack.c.l.b16 %v264
      %v511 = vunpack.c.l.b16 %v265
      %v512 = vunpack.c.l.b16 %v266
      %v513 = vunpack.c.l.b16 %v267
      %v514 = vunpack.c.l.b16 %v268
      %v515 = vunpack.c.l.b16 %v269
      %v516 = vunpack.c.l.b16 %v270
      %v517 = vunpack.c.l.b16 %v271
      %v518 = vunpack.c.l.b16 %v272
      %v519 = vunpack.c.l.b16 %v273
      %v520 = vunpack.c.l.b16 %v274
      %v521 = vunpack.c.l.b16 %v275
      %v522 = vunpack.c.l.b16 %v276
      %v523 = vunpack.c.l.b16 %v277
      %v524 = vpack.c.b16 %v509, %v508
      %v525 = vpack.c.b16 %v511, %v510
      %v526 = vpack.c.b16 %v513, %v512
      %v527 = vpack.c.b16 %v515, %v514
      %v528 = vpack.c.b16 %v517, %v516
      %v529 = vpack.c.b16 %v519, %v518
      %v530 = vpack.c.b16 %v521, %v520
      %v531 = vpack.c.b16 %v523, %v522
      %540 = vmatprep.subr.bf16.mxu0 0
      %541 = vmatpush1.bf16.msra.mxu0 %v531
      %542 = vmatprep.subr.bf16.mxu0 0
      %543 = vmatpush1.bf16.msra.mxu0 %v530
      %544 = vmatprep.subr.bf16.mxu0 0
      %545 = vmatpush1.bf16.msra.mxu0 %v529
      %546 = vmatprep.subr.bf16.mxu0 0
      %547 = vmatpush1.bf16.msra.mxu0 %v528
      %548 = vmatprep.subr.bf16.mxu0 0
      %549 = vmatpush1.bf16.msra.mxu0 %v527
      %550 = vmatprep.subr.bf16.mxu0 0
      %551 = vmatpush1.bf16.msra.mxu0 %v526
      %552 = vmatprep.subr.bf16.mxu0 0
      %553 = vmatpush1.bf16.msra.mxu0 %v525
      %554 = vmatprep.subr.bf16.mxu0 0
      %555 = vmatpush1.bf16.msra.mxu0 %v524
      %556 = vmatprep.subr.bf16.mxu0 0
      %557 = vmatpush2.bf16.msra.mxu0 0
      %558 = vmatprep.subr.bf16.mxu0 0
      %559 = vmatpush2.bf16.msra.mxu0 0
      %560 = vmatprep.subr.bf16.mxu0 0
      %561 = vmatpush2.bf16.msra.mxu0 0
      %562 = vmatprep.subr.bf16.mxu0 0
      %563 = vmatpush2.bf16.msra.mxu0 0
      %564 = vmatprep.subr.bf16.mxu0 0
      %565 = vmatpush2.bf16.msra.mxu0 0
      %566 = vmatprep.subr.bf16.mxu0 0
      %567 = vmatpush2.bf16.msra.mxu0 0
      %568 = vmatprep.subr.bf16.mxu0 0
      %569 = vmatpush2.bf16.msra.mxu0 0
      %570 = vmatprep.subr.bf16.mxu0 0
      %571 = vmatpush2.bf16.msra.mxu0 0
      %572 = vmatprep.mubr.bf16.mxu0 0
      %573 = vmatmul.mubr.bf16.gmra.mxu0 %v316
      %v574 = vpop.f32.mrf.mxu0
      %v575 = vadd.f32 %v449, %v574
      %v576 = vpop.f32.mrf.mxu0
      %v577 = vpop.f32.mrf.mxu0
      %v578 = vadd.f32 %v452, %v577
      %v579 = vpop.f32.mrf.mxu0
      %580 = vmatprep.mubr.bf16.mxu0 0
      %581 = vmatmul.mubr.bf16.gmra.mxu0 %v317
      %v582 = vpop.f32.mrf.mxu0
      %v583 = vadd.f32 %v457, %v582
      %v584 = vpop.f32.mrf.mxu0
      %v585 = vpop.f32.mrf.mxu0
      %v586 = vadd.f32 %v460, %v585
      %v587 = vpop.f32.mrf.mxu0
      %588 = vmatprep.mubr.bf16.mxu0 0
      %589 = vmatmul.mubr.bf16.gmra.mxu0 %v318
      %v590 = vpop.f32.mrf.mxu0
      %v591 = vadd.f32 %v465, %v590
      %v592 = vpop.f32.mrf.mxu0
      %v593 = vpop.f32.mrf.mxu0
      %v594 = vadd.f32 %v468, %v593
      %v595 = vpop.f32.mrf.mxu0
      %596 = vmatprep.mubr.bf16.mxu0 0
      %597 = vmatmul.mubr.bf16.gmra.mxu0 %v319
      %v598 = vpop.f32.mrf.mxu0
      %v599 = vadd.f32 %v473, %v598
      %v600 = vpop.f32.mrf.mxu0
      %v601 = vpop.f32.mrf.mxu0
      %v602 = vadd.f32 %v476, %v601
      %v603 = vpop.f32.mrf.mxu0
      %604 = vmatprep.mubr.bf16.mxu0 0
      %605 = vmatmul.mubr.bf16.gmra.mxu0 %v486
      %v606 = vpop.f32.mrf.mxu0
      %v607 = vadd.f32 %v481, %v606
      %v608 = vpop.f32.mrf.mxu0
      %v609 = vpop.f32.mrf.mxu0
      %v610 = vpop.f32.mrf.mxu0
      %611 = vdwg.mxu0
      %v612 = vld [vmem:[%s246 + $0x4] sm:$0xf]
      %v613 = vld [vmem:[%s246 + $0x8] sm:$0xf]
      %v614 = vld [vmem:[%s246 + $0xc] sm:$0xf]
      %v615 = vld [vmem:[%s246 + $0x10] sm:$0xf]
      %v616 = vld [vmem:[%s246 + $0x14] sm:$0xf]
      %v617 = vld [vmem:[%s246 + $0x18] sm:$0xf]
      %v618 = vld [vmem:[%s246 + $0x1c] sm:$0xf]
      %v619 = vld [vmem:[%s246 + $0x20] sm:$0xf]
      %v620 = vld [vmem:[%s246 + $0x24] sm:$0xf]
      %v621 = vld [vmem:[%s246 + $0x28] sm:$0x1]
      %s622 = scalar_lea.vmem %s1, 128
      %v623 = vld [vmem:[%s622] sm:$0xf]
      %v624 = vld [vmem:[%s622 + $0x4] sm:$0xf]
      %v625 = vld [vmem:[%s622 + $0x8] sm:$0xf]
      %v626 = vld [vmem:[%s622 + $0xc] sm:$0xf]
      %v627 = vld [vmem:[%s622 + $0x10] sm:$0xf]
      %v628 = vld [vmem:[%s622 + $0x14] sm:$0xf]
      %v629 = vld [vmem:[%s622 + $0x18] sm:$0xf]
      %v630 = vld [vmem:[%s622 + $0x1c] sm:$0xf]
      %v631 = vld [vmem:[%s622 + $0x20] sm:$0xf]
      %v632 = vld [vmem:[%s622 + $0x24] sm:$0xf]
      %v633 = vld [vmem:[%s622 + $0x28] sm:$0xf]
      %v634 = vld [vmem:[%s622 + $0x2c] sm:$0xf]
      %v635 = vld [vmem:[%s622 + $0x30] sm:$0xf]
      %v636 = vld [vmem:[%s622 + $0x34] sm:$0xf]
      %v637 = vld [vmem:[%s622 + $0x38] sm:$0xf]
      %v638 = vld [vmem:[%s622 + $0x3c] sm:$0xf]
      %v649 = vunpack.c.l.b16 %v612
      %v650 = vunpack.c.l.b16 %v613
      %v651 = vunpack.c.l.b16 %v614
      %v652 = vunpack.c.l.b16 %v615
      %v653 = vunpack.c.l.b16 %v616
      %v654 = vunpack.c.l.b16 %v617
      %v655 = vunpack.c.l.b16 %v618
      %v656 = vunpack.c.l.b16 %v619
      %v657 = vunpack.c.l.b16 %v620
      %v658 = vunpack.c.l.b16 %v621
      %v659 = vpack.c.b16 %v650, %v649
      %v660 = vpack.c.b16 %v652, %v651
      %v661 = vpack.c.b16 %v654, %v653
      %v662 = vpack.c.b16 %v656, %v655
      %v663 = vpack.c.b16 %v658, %v657
      %v665 = vshrl.u32 %v659, 16
      %v667 = vshll.u32 %v659, 16
      %v669 = vrot.slane %v667, 1
      %v670 = vor.u32 %v665, %v669
      %v672 = vshll.u32 %v660, 16
      %v674 = vrot.slane %v672, 1
      %v675 = vsel %vm321, %v670, %v674
      %v676 = vshrl.u32 %v660, 16
      %v678 = vor.u32 %v676, %v674
      %v680 = vshll.u32 %v661, 16
      %v682 = vrot.slane %v680, 1
      %v683 = vsel %vm321, %v678, %v682
      %v684 = vshrl.u32 %v661, 16
      %v686 = vor.u32 %v684, %v682
      %v688 = vshll.u32 %v662, 16
      %v690 = vrot.slane %v688, 1
      %v691 = vsel %vm321, %v686, %v690
      %v692 = vshrl.u32 %v662, 16
      %v694 = vor.u32 %v692, %v690
      %v696 = vshll.u32 %v663, 16
      %v698 = vrot.slane %v696, 1
      %v699 = vsel %vm321, %v694, %v698
      %v700 = vshrl.u32 %v663, 16
      %v702 = vor.u32 %v700, %v698
      %v724 = vunpack.c.l.b16 %v623
      %v725 = vunpack.c.l.b16 %v624
      %v726 = vunpack.c.l.b16 %v625
      %v727 = vunpack.c.l.b16 %v626
      %v728 = vunpack.c.l.b16 %v627
      %v729 = vunpack.c.l.b16 %v628
      %v730 = vunpack.c.l.b16 %v629
      %v731 = vunpack.c.l.b16 %v630
      %v732 = vunpack.c.l.b16 %v631
      %v733 = vunpack.c.l.b16 %v632
      %v734 = vunpack.c.l.b16 %v633
      %v735 = vunpack.c.l.b16 %v634
      %v736 = vunpack.c.l.b16 %v635
      %v737 = vunpack.c.l.b16 %v636
      %v738 = vunpack.c.l.b16 %v637
      %v739 = vunpack.c.l.b16 %v638
      %v740 = vpack.c.b16 %v725, %v724
      %v741 = vpack.c.b16 %v727, %v726
      %v742 = vpack.c.b16 %v729, %v728
      %v743 = vpack.c.b16 %v731, %v730
      %v744 = vpack.c.b16 %v733, %v732
      %v745 = vpack.c.b16 %v735, %v734
      %v746 = vpack.c.b16 %v737, %v736
      %v747 = vpack.c.b16 %v739, %v738
      %756 = vmatprep.subr.bf16.mxu0 0
      %757 = vmatpush1.bf16.msra.mxu0 %v747
      %758 = vmatprep.subr.bf16.mxu0 0
      %759 = vmatpush1.bf16.msra.mxu0 %v746
      %760 = vmatprep.subr.bf16.mxu0 0
      %761 = vmatpush1.bf16.msra.mxu0 %v745
      %762 = vmatprep.subr.bf16.mxu0 0
      %763 = vmatpush1.bf16.msra.mxu0 %v744
      %764 = vmatprep.subr.bf16.mxu0 0
      %765 = vmatpush1.bf16.msra.mxu0 %v743
      %766 = vmatprep.subr.bf16.mxu0 0
      %767 = vmatpush1.bf16.msra.mxu0 %v742
      %768 = vmatprep.subr.bf16.mxu0 0
      %769 = vmatpush1.bf16.msra.mxu0 %v741
      %770 = vmatprep.subr.bf16.mxu0 0
      %771 = vmatpush1.bf16.msra.mxu0 %v740
      %772 = vmatprep.subr.bf16.mxu0 0
      %773 = vmatpush2.bf16.msra.mxu0 0
      %774 = vmatprep.subr.bf16.mxu0 0
      %775 = vmatpush2.bf16.msra.mxu0 0
      %776 = vmatprep.subr.bf16.mxu0 0
      %777 = vmatpush2.bf16.msra.mxu0 0
      %778 = vmatprep.subr.bf16.mxu0 0
      %779 = vmatpush2.bf16.msra.mxu0 0
      %780 = vmatprep.subr.bf16.mxu0 0
      %781 = vmatpush2.bf16.msra.mxu0 0
      %782 = vmatprep.subr.bf16.mxu0 0
      %783 = vmatpush2.bf16.msra.mxu0 0
      %784 = vmatprep.subr.bf16.mxu0 0
      %785 = vmatpush2.bf16.msra.mxu0 0
      %786 = vmatprep.subr.bf16.mxu0 0
      %787 = vmatpush2.bf16.msra.mxu0 0
      %788 = vmatprep.mubr.bf16.mxu0 0
      %789 = vmatmul.mubr.bf16.gmra.mxu0 %v675
      %v790 = vpop.f32.mrf.mxu0
      %v791 = vadd.f32 0.0, %v790
      %v792 = vpop.f32.mrf.mxu0
      %v793 = vpop.f32.mrf.mxu0
      %v794 = vadd.f32 0.0, %v793
      %v795 = vpop.f32.mrf.mxu0
      %796 = vmatprep.mubr.bf16.mxu0 0
      %797 = vmatmul.mubr.bf16.gmra.mxu0 %v683
      %v798 = vpop.f32.mrf.mxu0
      %v799 = vadd.f32 0.0, %v798
      %v800 = vpop.f32.mrf.mxu0
      %v801 = vpop.f32.mrf.mxu0
      %v802 = vadd.f32 0.0, %v801
      %v803 = vpop.f32.mrf.mxu0
      %804 = vmatprep.mubr.bf16.mxu0 0
      %805 = vmatmul.mubr.bf16.gmra.mxu0 %v691
      %v806 = vpop.f32.mrf.mxu0
      %v807 = vadd.f32 0.0, %v806
      %v808 = vpop.f32.mrf.mxu0
      %v809 = vpop.f32.mrf.mxu0
      %v810 = vadd.f32 0.0, %v809
      %v811 = vpop.f32.mrf.mxu0
      %812 = vmatprep.mubr.bf16.mxu0 0
      %813 = vmatmul.mubr.bf16.gmra.mxu0 %v699
      %v814 = vpop.f32.mrf.mxu0
      %v815 = vadd.f32 0.0, %v814
      %v816 = vpop.f32.mrf.mxu0
      %v817 = vpop.f32.mrf.mxu0
      %v818 = vadd.f32 0.0, %v817
      %v819 = vpop.f32.mrf.mxu0
      %820 = vmatprep.mubr.bf16.mxu0 0
      %821 = vmatmul.mubr.bf16.gmra.mxu0 %v702
      %v822 = vpop.f32.mrf.mxu0
      %v823 = vadd.f32 0.0, %v822
      %v824 = vpop.f32.mrf.mxu0
      %v825 = vpop.f32.mrf.mxu0
      %v826 = vpop.f32.mrf.mxu0
      %827 = vdwg.mxu0
      %v828 = vadd.f32 %v575, %v791
      %v829 = vadd.f32 %v578, %v794
      %v830 = vadd.f32 %v583, %v799
      %v831 = vadd.f32 %v586, %v802
      %v832 = vadd.f32 %v591, %v807
      %v833 = vadd.f32 %v594, %v810
      %v834 = vadd.f32 %v599, %v815
      %v835 = vadd.f32 %v602, %v818
      %v836 = vadd.f32 %v607, %v823
      %v837 = vld [vmem:[%s246 + $0x4] sm:$0xe]
      %s838 = scalar_lea.vmem %s1, 192
      %v839 = vld [vmem:[%s838] sm:$0xf]
      %v840 = vld [vmem:[%s838 + $0x4] sm:$0xf]
      %v841 = vld [vmem:[%s838 + $0x8] sm:$0xf]
      %v842 = vld [vmem:[%s838 + $0xc] sm:$0xf]
      %v843 = vld [vmem:[%s838 + $0x10] sm:$0xf]
      %v844 = vld [vmem:[%s838 + $0x14] sm:$0xf]
      %v845 = vld [vmem:[%s838 + $0x18] sm:$0xf]
      %v846 = vld [vmem:[%s838 + $0x1c] sm:$0xf]
      %v847 = vld [vmem:[%s838 + $0x20] sm:$0xf]
      %v848 = vld [vmem:[%s838 + $0x24] sm:$0xf]
      %v849 = vld [vmem:[%s838 + $0x28] sm:$0xf]
      %v850 = vld [vmem:[%s838 + $0x2c] sm:$0xf]
      %v851 = vld [vmem:[%s838 + $0x30] sm:$0xf]
      %v852 = vld [vmem:[%s838 + $0x34] sm:$0xf]
      %v853 = vld [vmem:[%s838 + $0x38] sm:$0xf]
      %v854 = vld [vmem:[%s838 + $0x3c] sm:$0xf]
      %v856 = vunpack.c.l.b16 %v837
      %v857 = vpack.c.b16 %v650, %v856
      %vm858 = vcmask 1046528
      %v859 = vrot.slane %v857, 1
      %v860 = vrot.slane %v660, 1
      %v861 = vsel %vm858, %v859, %v860
      %v862 = vrot.slane %v661, 1
      %v863 = vsel %vm858, %v860, %v862
      %v864 = vrot.slane %v662, 1
      %v865 = vsel %vm858, %v862, %v864
      %v866 = vrot.slane %v663, 1
      %v867 = vsel %vm858, %v864, %v866
      %v889 = vunpack.c.l.b16 %v839
      %v890 = vunpack.c.l.b16 %v840
      %v891 = vunpack.c.l.b16 %v841
      %v892 = vunpack.c.l.b16 %v842
      %v893 = vunpack.c.l.b16 %v843
      %v894 = vunpack.c.l.b16 %v844
      %v895 = vunpack.c.l.b16 %v845
      %v896 = vunpack.c.l.b16 %v846
      %v897 = vunpack.c.l.b16 %v847
      %v898 = vunpack.c.l.b16 %v848
      %v899 = vunpack.c.l.b16 %v849
      %v900 = vunpack.c.l.b16 %v850
      %v901 = vunpack.c.l.b16 %v851
      %v902 = vunpack.c.l.b16 %v852
      %v903 = vunpack.c.l.b16 %v853
      %v904 = vunpack.c.l.b16 %v854
      %v905 = vpack.c.b16 %v890, %v889
      %v906 = vpack.c.b16 %v892, %v891
      %v907 = vpack.c.b16 %v894, %v893
      %v908 = vpack.c.b16 %v896, %v895
      %v909 = vpack.c.b16 %v898, %v897
      %v910 = vpack.c.b16 %v900, %v899
      %v911 = vpack.c.b16 %v902, %v901
      %v912 = vpack.c.b16 %v904, %v903
      %921 = vmatprep.subr.bf16.mxu0 0
      %922 = vmatpush1.bf16.msra.mxu0 %v912
      %923 = vmatprep.subr.bf16.mxu0 0
      %924 = vmatpush1.bf16.msra.mxu0 %v911
      %925 = vmatprep.subr.bf16.mxu0 0
      %926 = vmatpush1.bf16.msra.mxu0 %v910
      %927 = vmatprep.subr.bf16.mxu0 0
      %928 = vmatpush1.bf16.msra.mxu0 %v909
      %929 = vmatprep.subr.bf16.mxu0 0
      %930 = vmatpush1.bf16.msra.mxu0 %v908
      %931 = vmatprep.subr.bf16.mxu0 0
      %932 = vmatpush1.bf16.msra.mxu0 %v907
      %933 = vmatprep.subr.bf16.mxu0 0
      %934 = vmatpush1.bf16.msra.mxu0 %v906
      %935 = vmatprep.subr.bf16.mxu0 0
      %936 = vmatpush1.bf16.msra.mxu0 %v905
      %937 = vmatprep.subr.bf16.mxu0 0
      %938 = vmatpush2.bf16.msra.mxu0 0
      %939 = vmatprep.subr.bf16.mxu0 0
      %940 = vmatpush2.bf16.msra.mxu0 0
      %941 = vmatprep.subr.bf16.mxu0 0
      %942 = vmatpush2.bf16.msra.mxu0 0
      %943 = vmatprep.subr.bf16.mxu0 0
      %944 = vmatpush2.bf16.msra.mxu0 0
      %945 = vmatprep.subr.bf16.mxu0 0
      %946 = vmatpush2.bf16.msra.mxu0 0
      %947 = vmatprep.subr.bf16.mxu0 0
      %948 = vmatpush2.bf16.msra.mxu0 0
      %949 = vmatprep.subr.bf16.mxu0 0
      %950 = vmatpush2.bf16.msra.mxu0 0
      %951 = vmatprep.subr.bf16.mxu0 0
      %952 = vmatpush2.bf16.msra.mxu0 0
      %953 = vmatprep.mubr.bf16.mxu0 0
      %954 = vmatmul.mubr.bf16.gmra.mxu0 %v861
      %v955 = vpop.f32.mrf.mxu0
      %v956 = vadd.f32 0.0, %v955
      %v957 = vpop.f32.mrf.mxu0
      %v958 = vpop.f32.mrf.mxu0
      %v959 = vadd.f32 0.0, %v958
      %v960 = vpop.f32.mrf.mxu0
      %961 = vmatprep.mubr.bf16.mxu0 0
      %962 = vmatmul.mubr.bf16.gmra.mxu0 %v863
      %v963 = vpop.f32.mrf.mxu0
      %v964 = vadd.f32 0.0, %v963
      %v965 = vpop.f32.mrf.mxu0
      %v966 = vpop.f32.mrf.mxu0
      %v967 = vadd.f32 0.0, %v966
      %v968 = vpop.f32.mrf.mxu0
      %969 = vmatprep.mubr.bf16.mxu0 0
      %970 = vmatmul.mubr.bf16.gmra.mxu0 %v865
      %v971 = vpop.f32.mrf.mxu0
      %v972 = vadd.f32 0.0, %v971
      %v973 = vpop.f32.mrf.mxu0
      %v974 = vpop.f32.mrf.mxu0
      %v975 = vadd.f32 0.0, %v974
      %v976 = vpop.f32.mrf.mxu0
      %977 = vmatprep.mubr.bf16.mxu0 0
      %978 = vmatmul.mubr.bf16.gmra.mxu0 %v867
      %v979 = vpop.f32.mrf.mxu0
      %v980 = vadd.f32 0.0, %v979
      %v981 = vpop.f32.mrf.mxu0
      %v982 = vpop.f32.mrf.mxu0
      %v983 = vadd.f32 0.0, %v982
      %v984 = vpop.f32.mrf.mxu0
      %985 = vmatprep.mubr.bf16.mxu0 0
      %986 = vmatmul.mubr.bf16.gmra.mxu0 %v866
      %v987 = vpop.f32.mrf.mxu0
      %v988 = vadd.f32 0.0, %v987
      %v989 = vpop.f32.mrf.mxu0
      %v990 = vpop.f32.mrf.mxu0
      %v991 = vpop.f32.mrf.mxu0
      %992 = vdwg.mxu0
      %v993 = vadd.f32 %v828, %v956
      %v994 = vadd.f32 %v829, %v959
      %v995 = vadd.f32 %v830, %v964
      %v996 = vadd.f32 %v831, %v967
      %v997 = vadd.f32 %v832, %v972
      %v998 = vadd.f32 %v833, %v975
      %v999 = vadd.f32 %v834, %v980
      %v1000 = vadd.f32 %v835, %v983
      %v1001 = vadd.f32 %v836, %v988
      %v1002 = vld [vmem:[%s2] sm:$0x1]
      %v1004 = vlaneseq
      %v1005 = vshrl.u32 %v1004, 7
      %v1006 = vsub.s32 0, %v1005
      %v1007 = vrot.slane %v1002, %v1006
      %v1009 = vadd.f32 %v993, %v1007
      %v1010 = vadd.f32 %v994, %v1007
      %v1011 = vadd.f32 %v995, %v1007
      %v1012 = vadd.f32 %v996, %v1007
      %v1013 = vadd.f32 %v997, %v1007
      %v1014 = vadd.f32 %v998, %v1007
      %v1015 = vadd.f32 %v999, %v1007
      %v1016 = vadd.f32 %v1000, %v1007
      %v1017 = vadd.f32 %v1001, %v1007
      %v1018 = vmax.f32 %v1009, 0.0
      %v1019 = vmax.f32 %v1010, 0.0
      %v1020 = vmax.f32 %v1011, 0.0
      %v1021 = vmax.f32 %v1012, 0.0
      %v1022 = vmax.f32 %v1013, 0.0
      %v1023 = vmax.f32 %v1014, 0.0
      %v1024 = vmax.f32 %v1015, 0.0
      %v1025 = vmax.f32 %v1016, 0.0
      %v1026 = vmax.f32 %v1017, 0.0
      %v1027 = vpack.c.bf16 %v1019, %v1018
      %v1028 = vpack.c.bf16 %v1021, %v1020
      %v1029 = vpack.c.bf16 %v1023, %v1022
      %v1030 = vpack.c.bf16 %v1025, %v1024
      %v1031 = vpack.c.bf16 %v1026, %v1026
      %v1032 = vld [vmem:[%s3] sm:$0xf]
      %v1033 = vld [vmem:[%s3 + $0x4] sm:$0xf]
      %v1034 = vld [vmem:[%s3 + $0x8] sm:$0xf]
      %v1035 = vld [vmem:[%s3 + $0xc] sm:$0xf]
      %v1036 = vld [vmem:[%s3 + $0x10] sm:$0xf]
      %v1037 = vld [vmem:[%s3 + $0x14] sm:$0xf]
      %v1038 = vld [vmem:[%s3 + $0x18] sm:$0xf]
      %v1039 = vld [vmem:[%s3 + $0x1c] sm:$0xf]
      %v1040 = vld [vmem:[%s3 + $0x20] sm:$0xf]
      %v1041 = vld [vmem:[%s3 + $0x24] sm:$0xf]
      %v1042 = vld [vmem:[%s3 + $0x28] sm:$0xf]
      %v1043 = vld [vmem:[%s3 + $0x2c] sm:$0xf]
      %v1044 = vld [vmem:[%s3 + $0x30] sm:$0xf]
      %v1045 = vld [vmem:[%s3 + $0x34] sm:$0xf]
      %v1046 = vld [vmem:[%s3 + $0x38] sm:$0xf]
      %v1047 = vld [vmem:[%s3 + $0x3c] sm:$0xf]
      %v1048 = vld [vmem:[%s4] sm:$0xf]
      %v1049 = vld [vmem:[%s4 + $0x4] sm:$0xf]
      %v1050 = vld [vmem:[%s4 + $0x8] sm:$0xf]
      %v1051 = vld [vmem:[%s4 + $0xc] sm:$0xf]
      %v1052 = vld [vmem:[%s4 + $0x10] sm:$0xf]
      %v1053 = vld [vmem:[%s4 + $0x14] sm:$0xf]
      %v1054 = vld [vmem:[%s4 + $0x18] sm:$0xf]
      %v1055 = vld [vmem:[%s4 + $0x1c] sm:$0xf]
      %v1056 = vld [vmem:[%s4 + $0x20] sm:$0xf]
      %v1057 = vld [vmem:[%s4 + $0x24] sm:$0xf]
      %v1058 = vld [vmem:[%s4 + $0x28] sm:$0xf]
      %v1059 = vld [vmem:[%s4 + $0x2c] sm:$0xf]
      %v1060 = vld [vmem:[%s4 + $0x30] sm:$0xf]
      %v1061 = vld [vmem:[%s4 + $0x34] sm:$0xf]
      %v1062 = vld [vmem:[%s4 + $0x38] sm:$0xf]
      %v1063 = vld [vmem:[%s4 + $0x3c] sm:$0xf]
      %v1080 = vunpack.c.l.b16 %v1048
      %v1081 = vunpack.c.l.b16 %v1049
      %v1082 = vunpack.c.l.b16 %v1050
      %v1083 = vunpack.c.l.b16 %v1051
      %v1084 = vunpack.c.l.b16 %v1052
      %v1085 = vunpack.c.l.b16 %v1053
      %v1086 = vunpack.c.l.b16 %v1054
      %v1087 = vunpack.c.l.b16 %v1055
      %v1088 = vunpack.c.l.b16 %v1056
      %v1089 = vunpack.c.l.b16 %v1057
      %v1090 = vunpack.c.l.b16 %v1058
      %v1091 = vunpack.c.l.b16 %v1059
      %v1092 = vunpack.c.l.b16 %v1060
      %v1093 = vunpack.c.l.b16 %v1061
      %v1094 = vunpack.c.l.b16 %v1062
      %v1095 = vunpack.c.l.b16 %v1063
      %v1096 = vpack.c.b16 %v1081, %v1080
      %v1097 = vpack.c.b16 %v1083, %v1082
      %v1098 = vpack.c.b16 %v1085, %v1084
      %v1099 = vpack.c.b16 %v1087, %v1086
      %v1100 = vpack.c.b16 %v1089, %v1088
      %v1101 = vpack.c.b16 %v1091, %v1090
      %v1102 = vpack.c.b16 %v1093, %v1092
      %v1103 = vpack.c.b16 %v1095, %v1094
      %1112 = vmatprep.subr.bf16.mxu0 0
      %1113 = vmatpush1.bf16.msra.mxu0 %v1103
      %1114 = vmatprep.subr.bf16.mxu0 0
      %1115 = vmatpush1.bf16.msra.mxu0 %v1102
      %1116 = vmatprep.subr.bf16.mxu0 0
      %1117 = vmatpush1.bf16.msra.mxu0 %v1101
      %1118 = vmatprep.subr.bf16.mxu0 0
      %1119 = vmatpush1.bf16.msra.mxu0 %v1100
      %1120 = vmatprep.subr.bf16.mxu0 0
      %1121 = vmatpush1.bf16.msra.mxu0 %v1099
      %1122 = vmatprep.subr.bf16.mxu0 0
      %1123 = vmatpush1.bf16.msra.mxu0 %v1098
      %1124 = vmatprep.subr.bf16.mxu0 0
      %1125 = vmatpush1.bf16.msra.mxu0 %v1097
      %1126 = vmatprep.subr.bf16.mxu0 0
      %1127 = vmatpush1.bf16.msra.mxu0 %v1096
      %1128 = vmatprep.subr.bf16.mxu0 0
      %1129 = vmatpush2.bf16.msra.mxu0 0
      %1130 = vmatprep.subr.bf16.mxu0 0
      %1131 = vmatpush2.bf16.msra.mxu0 0
      %1132 = vmatprep.subr.bf16.mxu0 0
      %1133 = vmatpush2.bf16.msra.mxu0 0
      %1134 = vmatprep.subr.bf16.mxu0 0
      %1135 = vmatpush2.bf16.msra.mxu0 0
      %1136 = vmatprep.subr.bf16.mxu0 0
      %1137 = vmatpush2.bf16.msra.mxu0 0
      %1138 = vmatprep.subr.bf16.mxu0 0
      %1139 = vmatpush2.bf16.msra.mxu0 0
      %1140 = vmatprep.subr.bf16.mxu0 0
      %1141 = vmatpush2.bf16.msra.mxu0 0
      %1142 = vmatprep.subr.bf16.mxu0 0
      %1143 = vmatpush2.bf16.msra.mxu0 0
      %1144 = vmatprep.mubr.bf16.mxu0 0
      %1145 = vmatmul.mubr.bf16.gmra.mxu0 %v316
      %v1146 = vpop.f32.mrf.mxu0
      %v1147 = vadd.f32 0.0, %v1146
      %v1148 = vpop.f32.mrf.mxu0
      %v1149 = vpop.f32.mrf.mxu0
      %v1150 = vadd.f32 0.0, %v1149
      %v1151 = vpop.f32.mrf.mxu0
      %1152 = vmatprep.mubr.bf16.mxu0 0
      %1153 = vmatmul.mubr.bf16.gmra.mxu0 %v317
      %v1154 = vpop.f32.mrf.mxu0
      %v1155 = vadd.f32 0.0, %v1154
      %v1156 = vpop.f32.mrf.mxu0
      %v1157 = vpop.f32.mrf.mxu0
      %v1158 = vadd.f32 0.0, %v1157
      %v1159 = vpop.f32.mrf.mxu0
      %1160 = vmatprep.mubr.bf16.mxu0 0
      %1161 = vmatmul.mubr.bf16.gmra.mxu0 %v318
      %v1162 = vpop.f32.mrf.mxu0
      %v1163 = vadd.f32 0.0, %v1162
      %v1164 = vpop.f32.mrf.mxu0
      %v1165 = vpop.f32.mrf.mxu0
      %v1166 = vadd.f32 0.0, %v1165
      %v1167 = vpop.f32.mrf.mxu0
      %1168 = vmatprep.mubr.bf16.mxu0 0
      %1169 = vmatmul.mubr.bf16.gmra.mxu0 %v319
      %v1170 = vpop.f32.mrf.mxu0
      %v1171 = vadd.f32 0.0, %v1170
      %v1172 = vpop.f32.mrf.mxu0
      %v1173 = vpop.f32.mrf.mxu0
      %v1174 = vadd.f32 0.0, %v1173
      %v1175 = vpop.f32.mrf.mxu0
      %1176 = vmatprep.mubr.bf16.mxu0 0
      %1177 = vmatmul.mubr.bf16.gmra.mxu0 %v486
      %v1178 = vpop.f32.mrf.mxu0
      %v1179 = vadd.f32 0.0, %v1178
      %v1180 = vpop.f32.mrf.mxu0
      %v1181 = vpop.f32.mrf.mxu0
      %v1182 = vpop.f32.mrf.mxu0
      %1183 = vdwg.mxu0
      %v1200 = vunpack.c.l.b16 %v1032
      %v1201 = vunpack.c.l.b16 %v1033
      %v1202 = vunpack.c.l.b16 %v1034
      %v1203 = vunpack.c.l.b16 %v1035
      %v1204 = vunpack.c.l.b16 %v1036
      %v1205 = vunpack.c.l.b16 %v1037
      %v1206 = vunpack.c.l.b16 %v1038
      %v1207 = vunpack.c.l.b16 %v1039
      %v1208 = vunpack.c.l.b16 %v1040
      %v1209 = vunpack.c.l.b16 %v1041
      %v1210 = vunpack.c.l.b16 %v1042
      %v1211 = vunpack.c.l.b16 %v1043
      %v1212 = vunpack.c.l.b16 %v1044
      %v1213 = vunpack.c.l.b16 %v1045
      %v1214 = vunpack.c.l.b16 %v1046
      %v1215 = vunpack.c.l.b16 %v1047
      %v1216 = vpack.c.b16 %v1201, %v1200
      %v1217 = vpack.c.b16 %v1203, %v1202
      %v1218 = vpack.c.b16 %v1205, %v1204
      %v1219 = vpack.c.b16 %v1207, %v1206
      %v1220 = vpack.c.b16 %v1209, %v1208
      %v1221 = vpack.c.b16 %v1211, %v1210
      %v1222 = vpack.c.b16 %v1213, %v1212
      %v1223 = vpack.c.b16 %v1215, %v1214
      %1232 = vmatprep.subr.bf16.mxu0 0
      %1233 = vmatpush1.bf16.msra.mxu0 %v1223
      %1234 = vmatprep.subr.bf16.mxu0 0
      %1235 = vmatpush1.bf16.msra.mxu0 %v1222
      %1236 = vmatprep.subr.bf16.mxu0 0
      %1237 = vmatpush1.bf16.msra.mxu0 %v1221
      %1238 = vmatprep.subr.bf16.mxu0 0
      %1239 = vmatpush1.bf16.msra.mxu0 %v1220
      %1240 = vmatprep.subr.bf16.mxu0 0
      %1241 = vmatpush1.bf16.msra.mxu0 %v1219
      %1242 = vmatprep.subr.bf16.mxu0 0
      %1243 = vmatpush1.bf16.msra.mxu0 %v1218
      %1244 = vmatprep.subr.bf16.mxu0 0
      %1245 = vmatpush1.bf16.msra.mxu0 %v1217
      %1246 = vmatprep.subr.bf16.mxu0 0
      %1247 = vmatpush1.bf16.msra.mxu0 %v1216
      %1248 = vmatprep.subr.bf16.mxu0 0
      %1249 = vmatpush2.bf16.msra.mxu0 0
      %1250 = vmatprep.subr.bf16.mxu0 0
      %1251 = vmatpush2.bf16.msra.mxu0 0
      %1252 = vmatprep.subr.bf16.mxu0 0
      %1253 = vmatpush2.bf16.msra.mxu0 0
      %1254 = vmatprep.subr.bf16.mxu0 0
      %1255 = vmatpush2.bf16.msra.mxu0 0
      %1256 = vmatprep.subr.bf16.mxu0 0
      %1257 = vmatpush2.bf16.msra.mxu0 0
      %1258 = vmatprep.subr.bf16.mxu0 0
      %1259 = vmatpush2.bf16.msra.mxu0 0
      %1260 = vmatprep.subr.bf16.mxu0 0
      %1261 = vmatpush2.bf16.msra.mxu0 0
      %1262 = vmatprep.subr.bf16.mxu0 0
      %1263 = vmatpush2.bf16.msra.mxu0 0
      %1264 = vmatprep.mubr.bf16.mxu0 0
      %1265 = vmatmul.mubr.bf16.gmra.mxu0 %v1027
      %v1266 = vpop.f32.mrf.mxu0
      %v1267 = vadd.f32 %v1147, %v1266
      %v1268 = vpop.f32.mrf.mxu0
      %v1269 = vpop.f32.mrf.mxu0
      %v1270 = vadd.f32 %v1150, %v1269
      %v1271 = vpop.f32.mrf.mxu0
      %1272 = vmatprep.mubr.bf16.mxu0 0
      %1273 = vmatmul.mubr.bf16.gmra.mxu0 %v1028
      %v1274 = vpop.f32.mrf.mxu0
      %v1275 = vadd.f32 %v1155, %v1274
      %v1276 = vpop.f32.mrf.mxu0
      %v1277 = vpop.f32.mrf.mxu0
      %v1278 = vadd.f32 %v1158, %v1277
      %v1279 = vpop.f32.mrf.mxu0
      %1280 = vmatprep.mubr.bf16.mxu0 0
      %1281 = vmatmul.mubr.bf16.gmra.mxu0 %v1029
      %v1282 = vpop.f32.mrf.mxu0
      %v1283 = vadd.f32 %v1163, %v1282
      %v1284 = vpop.f32.mrf.mxu0
      %v1285 = vpop.f32.mrf.mxu0
      %v1286 = vadd.f32 %v1166, %v1285
      %v1287 = vpop.f32.mrf.mxu0
      %1288 = vmatprep.mubr.bf16.mxu0 0
      %1289 = vmatmul.mubr.bf16.gmra.mxu0 %v1030
      %v1290 = vpop.f32.mrf.mxu0
      %v1291 = vadd.f32 %v1171, %v1290
      %v1292 = vpop.f32.mrf.mxu0
      %v1293 = vpop.f32.mrf.mxu0
      %v1294 = vadd.f32 %v1174, %v1293
      %v1295 = vpop.f32.mrf.mxu0
      %1296 = vmatprep.mubr.bf16.mxu0 0
      %1297 = vmatmul.mubr.bf16.gmra.mxu0 %v1031
      %v1298 = vpop.f32.mrf.mxu0
      %v1299 = vadd.f32 %v1179, %v1298
      %v1300 = vpop.f32.mrf.mxu0
      %v1301 = vpop.f32.mrf.mxu0
      %v1302 = vpop.f32.mrf.mxu0
      %1303 = vdwg.mxu0
      %v1304 = vld [vmem:[%s5] sm:$0x1]
      %v1306 = vlaneseq
      %v1307 = vshrl.u32 %v1306, 7
      %v1308 = vsub.s32 0, %v1307
      %v1309 = vrot.slane %v1304, %v1308
      %v1311 = vadd.f32 %v1267, %v1309
      %v1312 = vadd.f32 %v1270, %v1309
      %v1313 = vadd.f32 %v1275, %v1309
      %v1314 = vadd.f32 %v1278, %v1309
      %v1315 = vadd.f32 %v1283, %v1309
      %v1316 = vadd.f32 %v1286, %v1309
      %v1317 = vadd.f32 %v1291, %v1309
      %v1318 = vadd.f32 %v1294, %v1309
      %v1319 = vadd.f32 %v1299, %v1309
      %v1320 = vmax.f32 %v1311, 0.0
      %v1321 = vmax.f32 %v1312, 0.0
      %v1322 = vmax.f32 %v1313, 0.0
      %v1323 = vmax.f32 %v1314, 0.0
      %v1324 = vmax.f32 %v1315, 0.0
      %v1325 = vmax.f32 %v1316, 0.0
      %v1326 = vmax.f32 %v1317, 0.0
      %v1327 = vmax.f32 %v1318, 0.0
      %v1328 = vmax.f32 %v1319, 0.0
      %1329 = vst [vmem:[%s251] sm:$0xff] %v1320
      %1330 = vst [vmem:[%s251 + $0x8] sm:$0xff] %v1321
      %1331 = vst [vmem:[%s251 + $0x10] sm:$0xff] %v1322
      %1332 = vst [vmem:[%s251 + $0x18] sm:$0xff] %v1323
      %1333 = vst [vmem:[%s251 + $0x20] sm:$0xff] %v1324
      %1334 = vst [vmem:[%s251 + $0x28] sm:$0xff] %v1325
      %1335 = vst [vmem:[%s251 + $0x30] sm:$0xff] %v1326
      %1336 = vst [vmem:[%s251 + $0x38] sm:$0xff] %v1327
      %1337 = vst [vmem:[%s251 + $0x40] sm:$0xff] %v1328
      %p1338 = scmp.lt.s32.totalorder %s17, 1
      %s1339 = scalar_select %p1338, %s17, 1
      %s1340 = smul.addr %s1339, 9
      %s1341 = smul.addr %s1340, 8
      %s1342 = scalar_lea.vmem %s6, %s1341
      // Predicated region
      $region45: #{basic_block_forward.1} parent=43 // pred_check
        %p1343 = pneg %p166
      $region46: #{basic_block_forward.1} parent=43 // pred_check_branch
        %1345 = sbr.rel (%p1343) target = $region48
      $region47: #{basic_block_forward.1} parent=43 // pred_region
        _
      $region48: #{basic_block_forward.1} parent=43 // pred_fallthru
        _
    $region44: #{basic_block_forward.1} parent=5 // pred_fallthru
      _
    %p1346 = scmp.le.s32.totalorder 2, %s12
    // Predicated region
    $region49: #{basic_block_forward.1} parent=5 // pred_check
      %p1347 = pneg %p1346
    $region50: #{basic_block_forward.1} parent=5 // pred_check_branch
      %1349 = sbr.rel (%p1347) target = $region52
    $region51: #{basic_block_forward.1} parent=5 // pred_region
      %s1350 = ssub.s32 %s12, 2
      // Predicated region
      $region53: #{basic_block_forward.1} parent=51 // pred_check
        %p1351 = pneg %p172
      $region54: #{basic_block_forward.1} parent=51 // pred_check_branch
        %1353 = sbr.rel (%p1351) target = $region56
      $region55: #{basic_block_forward.1} parent=51 // pred_region
        %p1354 = scmp.lt.s32.totalorder %s18, 1
        %s1355 = scalar_select %p1354, %s18, 1
        %s1356 = smul.addr %s1355, 9
        %s1357 = smul.addr %s1356, 8
        %s1358 = scalar_lea.vmem %s6, %s1357
      $region56: #{basic_block_forward.1} parent=51 // pred_fallthru
        _
    $region52: #{basic_block_forward.1} parent=5 // pred_fallthru
      _
  $region6: #{basic_block_forward.1} parent=0 // loop_footer
    %s16 = sadd.s32 1, %s12
  $region7: #{basic_block_forward.1} parent=0 // loop_footer_branch
    %11 = sbr.rel target = $region3
  $region8: #{basic_block_forward.1} parent=0 // loop_exit
    _

</llo_original>
